<compile_context>
chip_gen: v6e
topology: v6e:2x2x1
jax: 0.10.0
libtpu: 0.0.40
codegen_flags: <defaults>
</compile_context>

<pallas_src>
import jax
import jax.numpy as jnp
import numpy as np
from jax.experimental import pallas as pl
from jax.experimental.pallas import tpu as pltpu


def _round_up(x, m):
    return ((x + m - 1) // m) * m


def _make_kernel(block_g, n_pad, d_pad):
    def kernel(batch_ref, emb_ref, w_ref, out_ref):
        g0 = pl.program_id(0) * block_g

        emb = emb_ref[...]                                       # [n_pad, d_pad]
        batch_row = batch_ref[...]                               # [1, n_pad] int32

        # Graph-membership mask for this block of graphs (built in registers;
        # padded nodes carry batch id -1 and never match).
        gids = g0 + jax.lax.broadcasted_iota(jnp.int32, (block_g, n_pad), 0)
        mask = (batch_row == gids).astype(jnp.float32)           # [block_g, n_pad]
        counts = jnp.sum(mask, axis=1, keepdims=True)            # [block_g, 1]

        # global_mean_pool(emb @ W) == (mean of emb rows) @ W   (linearity).
        seg_sum = jnp.dot(mask, emb, preferred_element_type=jnp.float32)
        inv_cnt = pl.reciprocal(jnp.maximum(counts, 1.0), approx=False)
        ctx = jnp.dot(seg_sum * inv_cnt, w_ref[...],
                      preferred_element_type=jnp.float32)        # [block_g, d_pad]
        tg = jnp.tanh(ctx)                                       # [block_g, d_pad]

        # Per-node logits for every graph in the block (contract over D on MXU);
        # the mask zeroes contributions of nodes that belong to other graphs.
        s = jnp.einsum("gd,nd->gn", tg, emb,
                       preferred_element_type=jnp.float32)       # [block_g, n_pad]
        p = mask * jax.nn.sigmoid(s)                             # [block_g, n_pad]

        # global_add_pool(sigmoid_scores * emb, batch)
        out_ref[...] = jnp.dot(p, emb, preferred_element_type=jnp.float32)

    return kernel


def attention_module(embedding, batch, weight, num_graphs):
    """SimGNN AttentionModule forward.

    embedding: [N, D] f32, batch: [N] int32 graph id per node (any order),
    weight: [D, D] f32.  Returns [num_graphs, D] f32.
    """
    embedding = jnp.asarray(embedding, jnp.float32)
    weight = jnp.asarray(weight, jnp.float32)
    batch = jnp.asarray(batch, jnp.int32)
    n, d = embedding.shape

    d_pad = _round_up(d, 128)                       # lane-dense hidden dim
    n_pad = _round_up(max(n, 1), 128)               # lane-dense node axis for the mask
    block_g = min(_round_up(max(num_graphs, 1), 8), 256)   # graphs per grid step
    g_pad = _round_up(max(num_graphs, 1), block_g)
    grid = (g_pad // block_g,)

    emb_p = jnp.zeros((n_pad, d_pad), jnp.float32).at[:n, :d].set(embedding)
    w_p = jnp.zeros((d_pad, d_pad), jnp.float32).at[:d, :d].set(weight)
    batch_p = jnp.full((1, n_pad), -1, jnp.int32).at[0, :n].set(batch)

    kernel = _make_kernel(block_g, n_pad, d_pad)

    # VMEM budget: double-buffered resident inputs + output block + headroom
    # for in-kernel intermediates ([block_g, n_pad] mask/logits etc.).
    resident = 4 * (2 * n_pad * d_pad          # embedding
                    + 2 * d_pad * d_pad        # W
                    + 2 * 8 * n_pad            # batch row (int32, 8-sublane padded)
                    + 2 * block_g * d_pad)     # output block
    scratch = 4 * (4 * block_g * n_pad + 6 * block_g * d_pad)
    vmem_limit = int(min(max(resident + scratch + (8 << 20), 32 << 20), 128 << 20))

    out = pl.pallas_call(
        kernel,
        out_shape=jax.ShapeDtypeStruct((g_pad, d_pad), jnp.float32),
        grid=grid,
        in_specs=[
            pl.BlockSpec((1, n_pad), lambda i: (0, 0)),       # batch ids (resident)
            pl.BlockSpec((n_pad, d_pad), lambda i: (0, 0)),   # embedding (resident)
            pl.BlockSpec((d_pad, d_pad), lambda i: (0, 0)),   # W (resident)
        ],
        out_specs=pl.BlockSpec((block_g, d_pad), lambda i: (i, 0)),
        compiler_params=pltpu.CompilerParams(
            dimension_semantics=("parallel",),
            vmem_limit_bytes=vmem_limit),
    )(batch_p, emb_p, w_p)

    return out[:num_graphs, :d]


def reference(embedding, batch, weight, num_graphs):
    """Plain-JAX reference matching the PyTorch module."""
    transformed = embedding @ weight
    seg_sum = jax.ops.segment_sum(transformed, batch, num_segments=num_graphs)
    counts = jax.ops.segment_sum(jnp.ones((embedding.shape[0],), jnp.float32), batch,
                                 num_segments=num_graphs)
    global_context = seg_sum / jnp.maximum(counts, 1.0)[:, None]
    tg = jnp.tanh(global_context)
    scores = jax.nn.sigmoid(jnp.sum(embedding * tg[batch], axis=-1))
    rep = jax.ops.segment_sum(scores[:, None] * embedding, batch,
                              num_segments=num_graphs)
    return rep


if __name__ == "__main__":
    key = jax.random.PRNGKey(0)
    N, D, G = 16, 32, 4   # 16 nodes total, hidden_dim[-1] = 32, 4 graphs in the batch

    k_emb, k_w = jax.random.split(key)
    embedding = jax.random.normal(k_emb, (N, D), dtype=jnp.float32)

    # Xavier-uniform init for weight_matrix [D, D]
    bound = float(np.sqrt(6.0 / (D + D)))
    weight = jax.random.uniform(k_w, (D, D), dtype=jnp.float32,
                                minval=-bound, maxval=bound)

    # graph assignment per node (4 nodes per graph)
    batch = jnp.repeat(jnp.arange(G, dtype=jnp.int32), N // G)

    out = attention_module(embedding, batch, weight, G)
    out = jax.block_until_ready(out)

    ref = reference(embedding, batch, weight, G)
    np.testing.assert_allclose(np.asarray(out), np.asarray(ref), rtol=1e-4, atol=1e-5)

    print("KERNEL_OK")
</pallas_src>

<mosaic_0001>
module attributes {stable_mosaic.version = 11 : i64} {
  func.func @kernel(%arg0: i32, %arg1: memref<1x128xi32, #tpu.memory_space<vmem>>, %arg2: memref<128x128xf32, #tpu.memory_space<vmem>>, %arg3: memref<128x128xf32, #tpu.memory_space<vmem>>, %arg4: memref<8x128xf32, #tpu.memory_space<vmem>>) attributes {dimension_semantics = [#tpu.dimension_semantics<parallel>], iteration_bounds = array<i64: 1>, scalar_prefetch = 0 : i64, scratch_operands = 0 : i64, tpu.core_type = #tpu.core_type<tc>, window_params = [{pipeline_mode = #tpu.pipeline_mode<synchronous>, transform_indices = @transform_0, window_bounds = array<i64: 1, 128>}, {pipeline_mode = #tpu.pipeline_mode<synchronous>, transform_indices = @transform_1, window_bounds = array<i64: 128, 128>}, {pipeline_mode = #tpu.pipeline_mode<synchronous>, transform_indices = @transform_2, window_bounds = array<i64: 128, 128>}, {transform_indices = @transform_3, window_bounds = array<i64: 8, 128>}]} {
    %c8_i32 = arith.constant 8 : i32
    %0 = arith.muli %arg0, %c8_i32 : i32
    %c0 = arith.constant 0 : index
    %c0_0 = arith.constant 0 : index
    %1 = vector.load %arg2[%c0, %c0_0] : memref<128x128xf32, #tpu.memory_space<vmem>>, vector<128x128xf32>
    %c0_1 = arith.constant 0 : index
    %c0_2 = arith.constant 0 : index
    %2 = vector.load %arg1[%c0_1, %c0_2] : memref<1x128xi32, #tpu.memory_space<vmem>>, vector<1x128xi32>
    %3 = tpu.iota {dimensions = array<i32: 0>} : vector<8x128xi32>
    %4 = vector.broadcast %0 : i32 to vector<8x128xi32>
    %5 = arith.addi %4, %3 : vector<8x128xi32>
    %6 = vector.broadcast %2 : vector<1x128xi32> to vector<8x128xi32>
    %7 = arith.cmpi eq, %6, %5 : vector<8x128xi32>
    %8 = arith.extui %7 : vector<8x128xi1> to vector<8x128xi32>
    %9 = arith.sitofp %8 : vector<8x128xi32> to vector<8x128xf32>
    %cst = arith.constant dense<0.000000e+00> : vector<8xf32>
    %10 = vector.multi_reduction <add>, %9, %cst [1] : vector<8x128xf32> to vector<8xf32>
    %11 = vector.shape_cast %10 : vector<8xf32> to vector<8x1xf32>
    %cst_3 = arith.constant dense<0.000000e+00> : vector<8x128xf32>
    %12 = tpu.matmul %9, %1, %cst_3 {dimension_numbers = #tpu.dot_dimension_numbers<[1], [0], [0], [1], [0, 0, 1, 1], [], []>} : vector<8x128xf32>, vector<128x128xf32>, vector<8x128xf32> -> vector<8x128xf32>
    %cst_4 = arith.constant 1.000000e+00 : f32
    %13 = vector.broadcast %cst_4 : f32 to vector<8x1xf32>
    %14 = arith.maximumf %11, %13 : vector<8x1xf32>
    %15 = tpu.reciprocal %14 : vector<8x1xf32> -> vector<8x1xf32>
    %16 = vector.broadcast %15 : vector<8x1xf32> to vector<8x128xf32>
    %17 = arith.mulf %12, %16 : vector<8x128xf32>
    %c0_5 = arith.constant 0 : index
    %c0_6 = arith.constant 0 : index
    %18 = vector.load %arg3[%c0_5, %c0_6] : memref<128x128xf32, #tpu.memory_space<vmem>>, vector<128x128xf32>
    %cst_7 = arith.constant dense<0.000000e+00> : vector<8x128xf32>
    %19 = tpu.matmul %17, %18, %cst_7 {dimension_numbers = #tpu.dot_dimension_numbers<[1], [0], [0], [1], [0, 0, 1, 1], [], []>} : vector<8x128xf32>, vector<128x128xf32>, vector<8x128xf32> -> vector<8x128xf32>
    %20 = math.tanh %19 : vector<8x128xf32>
    "tpu.trace_start"() <{level = 10 : i32, message = "gd,nd->gn"}> : () -> ()
    %cst_8 = arith.constant dense<0.000000e+00> : vector<8x128xf32>
    %21 = tpu.matmul %20, %1, %cst_8 {dimension_numbers = #tpu.dot_dimension_numbers<[1], [1], [0], [0], [0, 0, 1, 0], [], []>} : vector<8x128xf32>, vector<128x128xf32>, vector<8x128xf32> -> vector<8x128xf32>
    "tpu.trace_stop"() : () -> ()
    %22 = arith.negf %21 : vector<8x128xf32>
    %23 = math.exp %22 : vector<8x128xf32>
    %cst_9 = arith.constant 1.000000e+00 : f32
    %24 = vector.broadcast %cst_9 : f32 to vector<8x128xf32>
    %25 = arith.addf %24, %23 : vector<8x128xf32>
    %26 = arith.divf %24, %25 : vector<8x128xf32>
    %27 = arith.mulf %9, %26 : vector<8x128xf32>
    %cst_10 = arith.constant dense<0.000000e+00> : vector<8x128xf32>
    %28 = tpu.matmul %27, %1, %cst_10 {dimension_numbers = #tpu.dot_dimension_numbers<[1], [0], [0], [1], [0, 0, 1, 1], [], []>} : vector<8x128xf32>, vector<128x128xf32>, vector<8x128xf32> -> vector<8x128xf32>
    %c0_11 = arith.constant 0 : index
    %c0_12 = arith.constant 0 : index
    %29 = vector.load %arg4[%c0_11, %c0_12] : memref<8x128xf32, #tpu.memory_space<vmem>>, vector<8x128xf32>
    tpu.vector_store %arg4[%c0_11, %c0_12], %28 {strides = array<i32>} : memref<8x128xf32, #tpu.memory_space<vmem>>, vector<8x128xf32>,
    return
  }
  func.func @transform_0(%arg0: i32) -> (i32, i32) {
    %c0_i32 = arith.constant 0 : i32
    %c0_i32_0 = arith.constant 0 : i32
    %c0_i32_1 = arith.constant 0 : i32
    return %c0_i32, %c0_i32_0 : i32, i32
  }
  func.func @transform_1(%arg0: i32) -> (i32, i32) {
    %c0_i32 = arith.constant 0 : i32
    %c0_i32_0 = arith.constant 0 : i32
    %c0_i32_1 = arith.constant 0 : i32
    return %c0_i32, %c0_i32_0 : i32, i32
  }
  func.func @transform_2(%arg0: i32) -> (i32, i32) {
    %c0_i32 = arith.constant 0 : i32
    %c0_i32_0 = arith.constant 0 : i32
    %c0_i32_1 = arith.constant 0 : i32
    return %c0_i32, %c0_i32_0 : i32, i32
  }
  func.func @transform_3(%arg0: i32) -> (i32, i32) {
    %c0_i32 = arith.constant 0 : i32
    %c0_i32_0 = arith.constant 0 : i32
    return %arg0, %c0_i32 : i32, i32
  }
}

</mosaic_0001>

<llo_original>
// kernel: tpu_custom_call.1
$region0: #{tpu_custom_call.1}
  #allocation0 [shape = 'u32[]', space=smem, size = 0x4, offset = 0x4, fixed_abs, tag = 'smem constant byte address 0x4 - core index']
  #allocation1 [shape = 'u32[144,128]{1,0:T(1,128)}', space=vmem, size = 0x12000, scoped, tag = 'internal scratch']
  %s0 = inlined_call_operand.hbm [shape: s32[1,128], index: 0, kind: input, shape index: {}]
  %s1 = inlined_call_operand.hbm [shape: f32[128,128], index: 1, kind: input, shape index: {}]
  %s2 = inlined_call_operand.hbm [shape: f32[128,128], index: 2, kind: input, shape index: {}]
  %s3 = inlined_call_operand.hbm [shape: f32[8,128], index: 3, kind: output, shape index: {}]
  %s4 = sld [smem:[#allocation0]]
  $region34: #{tpu_custom_call.1} parent=0
    _
  %s6 = ssub.s32 1, %s4
  %s7 = scalar_select 0, %s6, %s4
  $region1: #{tpu_custom_call.1} parent=0
    #allocation2 [shape = 'u8[512]{0}', space=vmem, size = 0x400, scoped, tag = 'input window, operand 0, single buffered']
    #allocation3 [shape = 's32[1]{0}', space=sflag, size = 0x4, scoped, tag = 'scoped memory for tpu_custom_call.1']
    #allocation4 [shape = 's32[1]{0}', space=sflag, size = 0x4, scoped, tag = 'scoped memory for tpu_custom_call.1']
    #allocation5 [shape = 'u8[65536]{0}', space=vmem, size = 0x10000, scoped, tag = 'input window, operand 1, single buffered']
    #allocation6 [shape = 's32[1]{0}', space=sflag, size = 0x4, scoped, tag = 'scoped memory for tpu_custom_call.1']
    #allocation7 [shape = 'u8[65536]{0}', space=vmem, size = 0x10000, scoped, tag = 'input window, operand 2, single buffered']
    #allocation8 [shape = 'u8[4096]{0}', space=vmem, size = 0x1000, scoped, tag = 'output window, operand 0, single buffered']
    %8 = vsyncpa [#allocation3], 0
    %9 = vsyncpa [#allocation6], 0
    %10 = vsyncpa [#allocation4], 0
    // Predicated region
    $region2: #{tpu_custom_call.1} parent=1 // pred_check
      _
    $region3: #{tpu_custom_call.1} parent=1 // pred_check_branch
      %12 = sbr.rel (0) target = $region5
    $region4: #{tpu_custom_call.1} parent=1 // pred_region
      %s14 = ssub.s32 16, 16
      %15 = vsyncadd [#allocation3], %s14
      %s17 = sshll.u32 [#allocation2], 4
      %s18 = int_to_ptr.vmem [resolvable:$true] %s17
      %20 = dma.hbm_to_vmem [thread:$0]  %s0, 16, %s18, [#allocation3]
    $region5: #{tpu_custom_call.1} parent=1 // pred_fallthru
      _
    // Predicated region
    $region6: #{tpu_custom_call.1} parent=1 // pred_check
      _
    $region7: #{tpu_custom_call.1} parent=1 // pred_check_branch
      %22 = sbr.rel (0) target = $region9
    $region8: #{tpu_custom_call.1} parent=1 // pred_region
      %s24 = ssub.s32 2048, 2048
      %25 = vsyncadd [#allocation6], %s24
      %s26 = sshll.u32 [#allocation5], 4
      %s27 = int_to_ptr.vmem [resolvable:$true] %s26
      %32 = dma.hbm_to_vmem [thread:$0]  %s1, 2048, %s27, [#allocation6], 128, 128, 8
    $region9: #{tpu_custom_call.1} parent=1 // pred_fallthru
      _
    // Predicated region
    $region10: #{tpu_custom_call.1} parent=1 // pred_check
      _
    $region11: #{tpu_custom_call.1} parent=1 // pred_check_branch
      %34 = sbr.rel (0) target = $region13
    $region12: #{tpu_custom_call.1} parent=1 // pred_region
      %s36 = ssub.s32 2048, 2048
      %37 = vsyncadd [#allocation6], %s36
      %s38 = sshll.u32 [#allocation7], 4
      %s39 = int_to_ptr.vmem [resolvable:$true] %s38
      %44 = dma.hbm_to_vmem [thread:$0]  %s2, 2048, %s39, [#allocation6], 128, 128, 8
    $region13: #{tpu_custom_call.1} parent=1 // pred_fallthru
      _
    // Predicated region
    $region14: #{tpu_custom_call.1} parent=1 // pred_check
      _
    $region15: #{tpu_custom_call.1} parent=1 // pred_check_branch
      %46 = sbr.rel (0) target = $region17
    $region16: #{tpu_custom_call.1} parent=1 // pred_region
      %47 = dma.done [#allocation3], 16
    $region17: #{tpu_custom_call.1} parent=1 // pred_fallthru
      _
    // Predicated region
    $region18: #{tpu_custom_call.1} parent=1 // pred_check
      _
    $region19: #{tpu_custom_call.1} parent=1 // pred_check_branch
      %49 = sbr.rel (0) target = $region21
    $region20: #{tpu_custom_call.1} parent=1 // pred_region
      %50 = dma.done [#allocation6], 2048
    $region21: #{tpu_custom_call.1} parent=1 // pred_fallthru
      _
    // Predicated region
    $region22: #{tpu_custom_call.1} parent=1 // pred_check
      _
    $region23: #{tpu_custom_call.1} parent=1 // pred_check_branch
      %52 = sbr.rel (0) target = $region25
    $region24: #{tpu_custom_call.1} parent=1 // pred_region
      %53 = dma.done [#allocation6], 2048
    $region25: #{tpu_custom_call.1} parent=1 // pred_fallthru
      _
    %s54 = smul.u32 0, 8
    %v55 = vld [vmem:[#allocation5] sm:$0xff]
    %v56 = vld [vmem:[#allocation5 + $0x8] sm:$0xff]
    %v57 = vld [vmem:[#allocation5 + $0x10] sm:$0xff]
    %v58 = vld [vmem:[#allocation5 + $0x18] sm:$0xff]
    %v59 = vld [vmem:[#allocation5 + $0x20] sm:$0xff]
    %v60 = vld [vmem:[#allocation5 + $0x28] sm:$0xff]
    %v61 = vld [vmem:[#allocation5 + $0x30] sm:$0xff]
    %v62 = vld [vmem:[#allocation5 + $0x38] sm:$0xff]
    %v63 = vld [vmem:[#allocation5 + $0x40] sm:$0xff]
    %v64 = vld [vmem:[#allocation5 + $0x48] sm:$0xff]
    %v65 = vld [vmem:[#allocation5 + $0x50] sm:$0xff]
    %v66 = vld [vmem:[#allocation5 + $0x58] sm:$0xff]
    %v67 = vld [vmem:[#allocation5 + $0x60] sm:$0xff]
    %v68 = vld [vmem:[#allocation5 + $0x68] sm:$0xff]
    %v69 = vld [vmem:[#allocation5 + $0x70] sm:$0xff]
    %v70 = vld [vmem:[#allocation5 + $0x78] sm:$0xff]
    %v71 = vld [vmem:[#allocation2] sm:$0x1]
    %v72 = vlaneseq
    %v73 = vshrl.u32 %v72, 7
    %v74 = vstv %s54
    %v75 = vadd.s32 %v74, %v73
    %v76 = vlaneseq
    %v77 = vshrl.u32 %v76, 7
    %v78 = vsub.s32 0, %v77
    %v79 = vrot.slane %v71, %v78
    %vm80 = vcmp.eq.s32.totalorder %v79, %v75
    %v81 = vsel %vm80, 1, 0
    %v82 = vcvt.s32.f32 %v81
    %83 = vadd.xlane.f32.xlu0 %v82
    %v84 = vpop.xlane.xlu0 %83
    %85 = vmatprep.subr.mxu0 0.0
    %86 = vmatpush1.msra.mxu0 %v70
    %87 = vmatprep.subr.mxu0 0.0
    %88 = vmatpush1.msra.mxu0 %v69
    %89 = vmatprep.subr.mxu0 0.0
    %90 = vmatpush1.msra.mxu0 %v68
    %91 = vmatprep.subr.mxu0 0.0
    %92 = vmatpush1.msra.mxu0 %v67
    %93 = vmatprep.subr.mxu0 0.0
    %94 = vmatpush1.msra.mxu0 %v66
    %95 = vmatprep.subr.mxu0 0.0
    %96 = vmatpush1.msra.mxu0 %v65
    %97 = vmatprep.subr.mxu0 0.0
    %98 = vmatpush1.msra.mxu0 %v64
    %99 = vmatprep.subr.mxu0 0.0
    %100 = vmatpush1.msra.mxu0 %v63
    %101 = vmatprep.subr.mxu0 0.0
    %102 = vmatpush1.msra.mxu0 %v62
    %103 = vmatprep.subr.mxu0 0.0
    %104 = vmatpush1.msra.mxu0 %v61
    %105 = vmatprep.subr.mxu0 0.0
    %106 = vmatpush1.msra.mxu0 %v60
    %107 = vmatprep.subr.mxu0 0.0
    %108 = vmatpush1.msra.mxu0 %v59
    %109 = vmatprep.subr.mxu0 0.0
    %110 = vmatpush1.msra.mxu0 %v58
    %111 = vmatprep.subr.mxu0 0.0
    %112 = vmatpush1.msra.mxu0 %v57
    %113 = vmatprep.subr.mxu0 0.0
    %114 = vmatpush1.msra.mxu0 %v56
    %115 = vmatprep.subr.mxu0 0.0
    %116 = vmatpush1.msra.mxu0 %v55
    %117 = vmatprep.subr.mxu0 0.0
    %118 = vmatpush2.msra.mxu0 0.0
    %119 = vmatprep.subr.mxu0 0.0
    %120 = vmatpush2.msra.mxu0 0.0
    %121 = vmatprep.subr.mxu0 0.0
    %122 = vmatpush2.msra.mxu0 0.0
    %123 = vmatprep.subr.mxu0 0.0
    %124 = vmatpush2.msra.mxu0 0.0
    %125 = vmatprep.subr.mxu0 0.0
    %126 = vmatpush2.msra.mxu0 0.0
    %127 = vmatprep.subr.mxu0 0.0
    %128 = vmatpush2.msra.mxu0 0.0
    %129 = vmatprep.subr.mxu0 0.0
    %130 = vmatpush2.msra.mxu0 0.0
    %131 = vmatprep.subr.mxu0 0.0
    %132 = vmatpush2.msra.mxu0 0.0
    %133 = vmatprep.subr.mxu0 0.0
    %134 = vmatpush2.msra.mxu0 0.0
    %135 = vmatprep.subr.mxu0 0.0
    %136 = vmatpush2.msra.mxu0 0.0
    %137 = vmatprep.subr.mxu0 0.0
    %138 = vmatpush2.msra.mxu0 0.0
    %139 = vmatprep.subr.mxu0 0.0
    %140 = vmatpush2.msra.mxu0 0.0
    %141 = vmatprep.subr.mxu0 0.0
    %142 = vmatpush2.msra.mxu0 0.0
    %143 = vmatprep.subr.mxu0 0.0
    %144 = vmatpush2.msra.mxu0 0.0
    %145 = vmatprep.subr.mxu0 0.0
    %146 = vmatpush2.msra.mxu0 0.0
    %147 = vmatprep.subr.mxu0 0.0
    %148 = vmatpush2.msra.mxu0 0.0
    %149 = vmatprep.mubr.f32.mxu0 0.0
    %150 = vmatmul.mubr.f32.gmra.mxu0 %v82
    %v151 = vpop.f32.mrf.mxu0
    %v152 = vadd.f32 0.0, %v151
    %v153 = vpop.f32.mrf.mxu0
    %154 = vdwg.mxu0
    %v155 = vmax.f32 %v84, 1.0
    %v156 = vrcp.pop %v155
    %v157 = vmul.f32 %v152, %v156
    %v158 = vld [vmem:[#allocation7] sm:$0xff]
    %v159 = vld [vmem:[#allocation7 + $0x8] sm:$0xff]
    %v160 = vld [vmem:[#allocation7 + $0x10] sm:$0xff]
    %v161 = vld [vmem:[#allocation7 + $0x18] sm:$0xff]
    %v162 = vld [vmem:[#allocation7 + $0x20] sm:$0xff]
    %v163 = vld [vmem:[#allocation7 + $0x28] sm:$0xff]
    %v164 = vld [vmem:[#allocation7 + $0x30] sm:$0xff]
    %v165 = vld [vmem:[#allocation7 + $0x38] sm:$0xff]
    %v166 = vld [vmem:[#allocation7 + $0x40] sm:$0xff]
    %v167 = vld [vmem:[#allocation7 + $0x48] sm:$0xff]
    %v168 = vld [vmem:[#allocation7 + $0x50] sm:$0xff]
    %v169 = vld [vmem:[#allocation7 + $0x58] sm:$0xff]
    %v170 = vld [vmem:[#allocation7 + $0x60] sm:$0xff]
    %v171 = vld [vmem:[#allocation7 + $0x68] sm:$0xff]
    %v172 = vld [vmem:[#allocation7 + $0x70] sm:$0xff]
    %v173 = vld [vmem:[#allocation7 + $0x78] sm:$0xff]
    %174 = vmatprep.subr.mxu0 0.0
    %175 = vmatpush1.msra.mxu0 %v173
    %176 = vmatprep.subr.mxu0 0.0
    %177 = vmatpush1.msra.mxu0 %v172
    %178 = vmatprep.subr.mxu0 0.0
    %179 = vmatpush1.msra.mxu0 %v171
    %180 = vmatprep.subr.mxu0 0.0
    %181 = vmatpush1.msra.mxu0 %v170
    %182 = vmatprep.subr.mxu0 0.0
    %183 = vmatpush1.msra.mxu0 %v169
    %184 = vmatprep.subr.mxu0 0.0
    %185 = vmatpush1.msra.mxu0 %v168
    %186 = vmatprep.subr.mxu0 0.0
    %187 = vmatpush1.msra.mxu0 %v167
    %188 = vmatprep.subr.mxu0 0.0
    %189 = vmatpush1.msra.mxu0 %v166
    %190 = vmatprep.subr.mxu0 0.0
    %191 = vmatpush1.msra.mxu0 %v165
    %192 = vmatprep.subr.mxu0 0.0
    %193 = vmatpush1.msra.mxu0 %v164
    %194 = vmatprep.subr.mxu0 0.0
    %195 = vmatpush1.msra.mxu0 %v163
    %196 = vmatprep.subr.mxu0 0.0
    %197 = vmatpush1.msra.mxu0 %v162
    %198 = vmatprep.subr.mxu0 0.0
    %199 = vmatpush1.msra.mxu0 %v161
    %200 = vmatprep.subr.mxu0 0.0
    %201 = vmatpush1.msra.mxu0 %v160
    %202 = vmatprep.subr.mxu0 0.0
    %203 = vmatpush1.msra.mxu0 %v159
    %204 = vmatprep.subr.mxu0 0.0
    %205 = vmatpush1.msra.mxu0 %v158
    %206 = vmatprep.subr.mxu0 0.0
    %207 = vmatpush2.msra.mxu0 0.0
    %208 = vmatprep.subr.mxu0 0.0
    %209 = vmatpush2.msra.mxu0 0.0
    %210 = vmatprep.subr.mxu0 0.0
    %211 = vmatpush2.msra.mxu0 0.0
    %212 = vmatprep.subr.mxu0 0.0
    %213 = vmatpush2.msra.mxu0 0.0
    %214 = vmatprep.subr.mxu0 0.0
    %215 = vmatpush2.msra.mxu0 0.0
    %216 = vmatprep.subr.mxu0 0.0
    %217 = vmatpush2.msra.mxu0 0.0
    %218 = vmatprep.subr.mxu0 0.0
    %219 = vmatpush2.msra.mxu0 0.0
    %220 = vmatprep.subr.mxu0 0.0
    %221 = vmatpush2.msra.mxu0 0.0
    %222 = vmatprep.subr.mxu0 0.0
    %223 = vmatpush2.msra.mxu0 0.0
    %224 = vmatprep.subr.mxu0 0.0
    %225 = vmatpush2.msra.mxu0 0.0
    %226 = vmatprep.subr.mxu0 0.0
    %227 = vmatpush2.msra.mxu0 0.0
    %228 = vmatprep.subr.mxu0 0.0
    %229 = vmatpush2.msra.mxu0 0.0
    %230 = vmatprep.subr.mxu0 0.0
    %231 = vmatpush2.msra.mxu0 0.0
    %232 = vmatprep.subr.mxu0 0.0
    %233 = vmatpush2.msra.mxu0 0.0
    %234 = vmatprep.subr.mxu0 0.0
    %235 = vmatpush2.msra.mxu0 0.0
    %236 = vmatprep.subr.mxu0 0.0
    %237 = vmatpush2.msra.mxu0 0.0
    %238 = vmatprep.mubr.f32.mxu0 0.0
    %239 = vmatmul.mubr.f32.gmra.mxu0 %v157
    %v240 = vpop.f32.mrf.mxu0
    %v241 = vadd.f32 0.0, %v240
    %v242 = vpop.f32.mrf.mxu0
    %243 = vdwg.mxu0
    %v244 = vtanh.pop %v241
    %245 = vmatprep.subr.mxu0 0.0
    %246 = vmatpush1.xpose.msra.mxu0 %v70
    %247 = vmatprep.subr.mxu0 0.0
    %248 = vmatpush1.xpose.msra.mxu0 %v69
    %249 = vmatprep.subr.mxu0 0.0
    %250 = vmatpush1.xpose.msra.mxu0 %v68
    %251 = vmatprep.subr.mxu0 0.0
    %252 = vmatpush1.xpose.msra.mxu0 %v67
    %253 = vmatprep.subr.mxu0 0.0
    %254 = vmatpush1.xpose.msra.mxu0 %v66
    %255 = vmatprep.subr.mxu0 0.0
    %256 = vmatpush1.xpose.msra.mxu0 %v65
    %257 = vmatprep.subr.mxu0 0.0
    %258 = vmatpush1.xpose.msra.mxu0 %v64
    %259 = vmatprep.subr.mxu0 0.0
    %260 = vmatpush1.xpose.msra.mxu0 %v63
    %261 = vmatprep.subr.mxu0 0.0
    %262 = vmatpush1.xpose.msra.mxu0 %v62
    %263 = vmatprep.subr.mxu0 0.0
    %264 = vmatpush1.xpose.msra.mxu0 %v61
    %265 = vmatprep.subr.mxu0 0.0
    %266 = vmatpush1.xpose.msra.mxu0 %v60
    %267 = vmatprep.subr.mxu0 0.0
    %268 = vmatpush1.xpose.msra.mxu0 %v59
    %269 = vmatprep.subr.mxu0 0.0
    %270 = vmatpush1.xpose.msra.mxu0 %v58
    %271 = vmatprep.subr.mxu0 0.0
    %272 = vmatpush1.xpose.msra.mxu0 %v57
    %273 = vmatprep.subr.mxu0 0.0
    %274 = vmatpush1.xpose.msra.mxu0 %v56
    %275 = vmatprep.subr.mxu0 0.0
    %276 = vmatpush1.xpose.msra.mxu0 %v55
    %277 = vmatprep.subr.mxu0 0.0
    %278 = vmatpush2.xpose.msra.mxu0 0.0
    %279 = vmatprep.subr.mxu0 0.0
    %280 = vmatpush2.xpose.msra.mxu0 0.0
    %281 = vmatprep.subr.mxu0 0.0
    %282 = vmatpush2.xpose.msra.mxu0 0.0
    %283 = vmatprep.subr.mxu0 0.0
    %284 = vmatpush2.xpose.msra.mxu0 0.0
    %285 = vmatprep.subr.mxu0 0.0
    %286 = vmatpush2.xpose.msra.mxu0 0.0
    %287 = vmatprep.subr.mxu0 0.0
    %288 = vmatpush2.xpose.msra.mxu0 0.0
    %289 = vmatprep.subr.mxu0 0.0
    %290 = vmatpush2.xpose.msra.mxu0 0.0
    %291 = vmatprep.subr.mxu0 0.0
    %292 = vmatpush2.xpose.msra.mxu0 0.0
    %293 = vmatprep.subr.mxu0 0.0
    %294 = vmatpush2.xpose.msra.mxu0 0.0
    %295 = vmatprep.subr.mxu0 0.0
    %296 = vmatpush2.xpose.msra.mxu0 0.0
    %297 = vmatprep.subr.mxu0 0.0
    %298 = vmatpush2.xpose.msra.mxu0 0.0
    %299 = vmatprep.subr.mxu0 0.0
    %300 = vmatpush2.xpose.msra.mxu0 0.0
    %301 = vmatprep.subr.mxu0 0.0
    %302 = vmatpush2.xpose.msra.mxu0 0.0
    %303 = vmatprep.subr.mxu0 0.0
    %304 = vmatpush2.xpose.msra.mxu0 0.0
    %305 = vmatprep.subr.mxu0 0.0
    %306 = vmatpush2.xpose.msra.mxu0 0.0
    %307 = vmatprep.subr.mxu0 0.0
    %308 = vmatpush2.xpose.msra.mxu0 0.0
    %309 = vmatprep.mubr.f32.mxu0 0.0
    %310 = vmatmul.mubr.f32.gmra.mxu0 %v244
    %v311 = vpop.f32.mrf.mxu0
    %v312 = vadd.f32 0.0, %v311
    %v313 = vpop.f32.mrf.mxu0
    %314 = vdwg.mxu0
    %v315 = vxor.u32 %v312, 2147483648
    %v316 = vmul.f32 %v315, 1.442695
    %v317 = vpow.pop %v316
    %v318 = vadd.f32 %v317, 1.0
    %v319 = vrcp.pop %v318
    %v320 = vmul.f32 1.0, %v319
    %v321 = vmul.f32 %v82, %v320
    %322 = vmatprep.subr.mxu0 0.0
    %323 = vmatpush1.msra.mxu0 %v70
    %324 = vmatprep.subr.mxu0 0.0
    %325 = vmatpush1.msra.mxu0 %v69
    %326 = vmatprep.subr.mxu0 0.0
    %327 = vmatpush1.msra.mxu0 %v68
    %328 = vmatprep.subr.mxu0 0.0
    %329 = vmatpush1.msra.mxu0 %v67
    %330 = vmatprep.subr.mxu0 0.0
    %331 = vmatpush1.msra.mxu0 %v66
    %332 = vmatprep.subr.mxu0 0.0
    %333 = vmatpush1.msra.mxu0 %v65
    %334 = vmatprep.subr.mxu0 0.0
    %335 = vmatpush1.msra.mxu0 %v64
    %336 = vmatprep.subr.mxu0 0.0
    %337 = vmatpush1.msra.mxu0 %v63
    %338 = vmatprep.subr.mxu0 0.0
    %339 = vmatpush1.msra.mxu0 %v62
    %340 = vmatprep.subr.mxu0 0.0
    %341 = vmatpush1.msra.mxu0 %v61
    %342 = vmatprep.subr.mxu0 0.0
    %343 = vmatpush1.msra.mxu0 %v60
    %344 = vmatprep.subr.mxu0 0.0
    %345 = vmatpush1.msra.mxu0 %v59
    %346 = vmatprep.subr.mxu0 0.0
    %347 = vmatpush1.msra.mxu0 %v58
    %348 = vmatprep.subr.mxu0 0.0
    %349 = vmatpush1.msra.mxu0 %v57
    %350 = vmatprep.subr.mxu0 0.0
    %351 = vmatpush1.msra.mxu0 %v56
    %352 = vmatprep.subr.mxu0 0.0
    %353 = vmatpush1.msra.mxu0 %v55
    %354 = vmatprep.subr.mxu0 0.0
    %355 = vmatpush2.msra.mxu0 0.0
    %356 = vmatprep.subr.mxu0 0.0
    %357 = vmatpush2.msra.mxu0 0.0
    %358 = vmatprep.subr.mxu0 0.0
    %359 = vmatpush2.msra.mxu0 0.0
    %360 = vmatprep.subr.mxu0 0.0
    %361 = vmatpush2.msra.mxu0 0.0
    %362 = vmatprep.subr.mxu0 0.0
    %363 = vmatpush2.msra.mxu0 0.0
    %364 = vmatprep.subr.mxu0 0.0
    %365 = vmatpush2.msra.mxu0 0.0
    %366 = vmatprep.subr.mxu0 0.0
    %367 = vmatpush2.msra.mxu0 0.0
    %368 = vmatprep.subr.mxu0 0.0
    %369 = vmatpush2.msra.mxu0 0.0
    %370 = vmatprep.subr.mxu0 0.0
    %371 = vmatpush2.msra.mxu0 0.0
    %372 = vmatprep.subr.mxu0 0.0
    %373 = vmatpush2.msra.mxu0 0.0
    %374 = vmatprep.subr.mxu0 0.0
    %375 = vmatpush2.msra.mxu0 0.0
    %376 = vmatprep.subr.mxu0 0.0
    %377 = vmatpush2.msra.mxu0 0.0
    %378 = vmatprep.subr.mxu0 0.0
    %379 = vmatpush2.msra.mxu0 0.0
    %380 = vmatprep.subr.mxu0 0.0
    %381 = vmatpush2.msra.mxu0 0.0
    %382 = vmatprep.subr.mxu0 0.0
    %383 = vmatpush2.msra.mxu0 0.0
    %384 = vmatprep.subr.mxu0 0.0
    %385 = vmatpush2.msra.mxu0 0.0
    %386 = vmatprep.mubr.f32.mxu0 0.0
    %387 = vmatmul.mubr.f32.gmra.mxu0 %v321
    %v388 = vpop.f32.mrf.mxu0
    %v389 = vadd.f32 0.0, %v388
    %v390 = vpop.f32.mrf.mxu0
    %391 = vdwg.mxu0
    %392 = vst [vmem:[#allocation8] sm:$0xff] %v389
    // Predicated region
    $region26: #{tpu_custom_call.1} parent=1 // pred_check
      _
    $region27: #{tpu_custom_call.1} parent=1 // pred_check_branch
      %394 = sbr.rel (0) target = $region29
    $region28: #{tpu_custom_call.1} parent=1 // pred_region
      %s396 = ssub.s32 128, 128
      %397 = vsyncadd [#allocation4], %s396
      %s399 = sshll.u32 [#allocation8], 4
      %s400 = int_to_ptr.vmem [resolvable:$true] %s399
      %402 = dma.vmem_to_hbm [thread:$0]  %s400, 128, %s3, [#allocation4]
    $region29: #{tpu_custom_call.1} parent=1 // pred_fallthru
      _
    // Predicated region
    $region30: #{tpu_custom_call.1} parent=1 // pred_check
      _
    $region31: #{tpu_custom_call.1} parent=1 // pred_check_branch
      %404 = sbr.rel (0) target = $region33
    $region32: #{tpu_custom_call.1} parent=1 // pred_region
      %405 = dma.done [#allocation4], 128
    $region33: #{tpu_custom_call.1} parent=1 // pred_fallthru
      _
    %406 = vsyncpa [#allocation3], 1
    %407 = vsyncpa [#allocation6], 1
    %408 = vsyncpa [#allocation4], 1

</llo_original>
